<compile_context>
chip_gen: v7x
topology: tpu7x:2x2x1
jax: 0.10.0
libtpu: 0.0.40
codegen_flags: <defaults>
</compile_context>

<pallas_src>
import jax
import jax.numpy as jnp
from jax import lax
from jax.experimental import pallas as pl
from jax.experimental.pallas import tpu as pltpu

EPS = 1e-5
_VMEM_LIMIT = 32 * 1024 * 1024  # explicit; safe on v7x (64 MiB phys) and v5e/v6e.


def conv_stats_kernel(w_ref, p_ref, conv_ref, sum_ref, ssq_ref):
    """Per M-tile: conv(Cout,TM) = W(Cout,K) @ patchesT(K,TM); accumulate channel stats."""
    @pl.when(pl.program_id(0) == 0)
    def _():
        sum_ref[...] = jnp.zeros_like(sum_ref)
        ssq_ref[...] = jnp.zeros_like(ssq_ref)

    conv = jnp.dot(w_ref[...], p_ref[...], preferred_element_type=jnp.float32)  # (Cout, TM)
    conv_ref[...] = conv
    # Lane-axis (XLU) reductions. Padded M columns are exact zeros (no bias), so they
    # contribute nothing to sum / sumsq; division by the true M happens in the wrapper.
    sum_ref[...] += jnp.sum(conv, axis=1, keepdims=True)
    ssq_ref[...] += jnp.sum(conv * conv, axis=1, keepdims=True)


def bn_relu_kernel(conv_ref, scale_ref, shift_ref, o_ref):
    """Folded BN + ReLU: one FMA + one max over the lane-dense (Cout, TM) tile."""
    o_ref[...] = jnp.maximum(conv_ref[...] * scale_ref[...] + shift_ref[...], 0.0)


def _im2col_stride2_kM(x, kh=3, kw=3, pad=1, stride=2):
    """x: (N,Cin,H,W) -> patchesT (K, M); K ordered (cin, kh, kw), M ordered (n, oh, ow)."""
    n, c, h, w = x.shape
    oh = (h + 2 * pad - kh) // stride + 1
    ow = (w + 2 * pad - kw) // stride + 1
    xp = jnp.pad(x, ((0, 0), (0, 0), (pad, pad), (pad, pad)))
    pieces = []
    for ih in range(kh):
        for iw in range(kw):
            pieces.append(xp[:, :, ih:ih + stride * oh:stride, iw:iw + stride * ow:stride])
    p = jnp.stack(pieces, axis=0)                # (kh*kw, N, C, OH, OW)
    p = jnp.transpose(p, (2, 0, 1, 3, 4))        # (C, kh*kw, N, OH, OW)
    return p.reshape(c * kh * kw, n * oh * ow), oh, ow


def downblock_forward(x, conv_w, conv_b, bn_gamma, bn_beta, tm_max=512):
    """x: (N, Cin, H, W) NCHW; conv_w: (Cout, Cin, 3, 3); returns (N, Cout, OH, OW)."""
    n, cin, h, w = x.shape
    cout = conv_w.shape[0]

    # conv_b accepted for API parity but intentionally unused: a per-channel bias is
    # exactly removed by train-mode BatchNorm's mean subtraction.
    del conv_b

    # TODO(synk): avoid the 9x im2col HBM materialization by expressing the conv as a
    # sum of 9 shifted (Cout,Cin)x(Cin,TM) matmuls streamed from the padded input.
    patches_t, oh, ow = _im2col_stride2_kM(x)    # (K, M)
    k, m = patches_t.shape

    # M tile: multiple of 128 lanes, capped for VMEM headroom; pad M with zero columns.
    m128 = ((m + 127) // 128) * 128
    tm = min(tm_max, m128)
    m_pad = ((m128 + tm - 1) // tm) * tm
    if m_pad != m:
        patches_t = jnp.pad(patches_t, ((0, 0), (0, m_pad - m)))
    grid_m = m_pad // tm

    # On v6e/v7x the matmul inputs could be cast to bf16 (keep f32 accumulate & stats)
    # for 2x DMA/MXU throughput; kept f32 here to preserve the 1e-4 reference tolerance.
    w_mat = conv_w.reshape(cout, cin * 9).astype(jnp.float32)    # (Cout, K)

    conv_cm, ch_sum, ch_ssq = pl.pallas_call(
        conv_stats_kernel,
        out_shape=(
            jax.ShapeDtypeStruct((cout, m_pad), jnp.float32),
            jax.ShapeDtypeStruct((cout, 1), jnp.float32),
            jax.ShapeDtypeStruct((cout, 1), jnp.float32),
        ),
        grid=(grid_m,),
        in_specs=[
            pl.BlockSpec((cout, k), lambda j: (0, 0)),
            pl.BlockSpec((k, tm), lambda j: (0, j)),
        ],
        out_specs=(
            pl.BlockSpec((cout, tm), lambda j: (0, j)),
            pl.BlockSpec((cout, 1), lambda j: (0, 0)),
            pl.BlockSpec((cout, 1), lambda j: (0, 0)),
        ),
        compiler_params=pltpu.CompilerParams(
            dimension_semantics=("arbitrary",),
            vmem_limit_bytes=_VMEM_LIMIT,
        ),
    )(w_mat, patches_t)

    # Fold BN into a per-channel scale/shift (tiny (Cout,1) math; f32 accumulators).
    count = jnp.float32(m)
    mean = ch_sum / count
    var = jnp.maximum(ch_ssq / count - mean * mean, 0.0)
    scale = bn_gamma.reshape(cout, 1).astype(jnp.float32) * lax.rsqrt(var + EPS)
    shift = bn_beta.reshape(cout, 1).astype(jnp.float32) - scale * mean

    out_cm = pl.pallas_call(
        bn_relu_kernel,
        out_shape=jax.ShapeDtypeStruct((cout, m_pad), jnp.float32),
        grid=(grid_m,),
        in_specs=[
            pl.BlockSpec((cout, tm), lambda j: (0, j)),
            pl.BlockSpec((cout, 1), lambda j: (0, 0)),
            pl.BlockSpec((cout, 1), lambda j: (0, 0)),
        ],
        out_specs=pl.BlockSpec((cout, tm), lambda j: (0, j)),
        compiler_params=pltpu.CompilerParams(
            dimension_semantics=("parallel",),
            vmem_limit_bytes=_VMEM_LIMIT,
        ),
    )(conv_cm, scale, shift)

    # (Cout, M) -> (Cout, N, OH, OW) -> NCHW
    out = out_cm[:, :m].reshape(cout, n, oh, ow)
    return jnp.transpose(out, (1, 0, 2, 3))


def reference_forward(x, conv_w, conv_b, bn_gamma, bn_beta):
    """Pure-JAX reference mirroring PyTorch DownBlock (train-mode BatchNorm, with bias)."""
    conv = lax.conv_general_dilated(
        x, conv_w, window_strides=(2, 2), padding=((1, 1), (1, 1)),
        dimension_numbers=("NCHW", "OIHW", "NCHW"))
    conv = conv + conv_b.reshape(1, -1, 1, 1)
    mean = jnp.mean(conv, axis=(0, 2, 3), keepdims=True)
    var = jnp.mean(jnp.square(conv - mean), axis=(0, 2, 3), keepdims=True)
    xhat = (conv - mean) * lax.rsqrt(var + EPS)
    out = xhat * bn_gamma.reshape(1, -1, 1, 1) + bn_beta.reshape(1, -1, 1, 1)
    return jnp.maximum(out, 0.0)


if __name__ == "__main__":
    # Small shapes consistent with the module: batch=2, in_features=4, out_features=8, 16x16.
    N, CIN, COUT, H, W = 2, 4, 8, 16, 16

    key = jax.random.PRNGKey(0)
    kx, kw, kb, kg, kbeta = jax.random.split(key, 5)

    x = jax.random.normal(kx, (N, CIN, H, W), dtype=jnp.float32)
    conv_w = jax.random.normal(kw, (COUT, CIN, 3, 3), dtype=jnp.float32) * 0.1
    conv_b = jax.random.normal(kb, (COUT,), dtype=jnp.float32) * 0.1
    bn_gamma = 1.0 + 0.1 * jax.random.normal(kg, (COUT,), dtype=jnp.float32)
    bn_beta = 0.1 * jax.random.normal(kbeta, (COUT,), dtype=jnp.float32)

    out = downblock_forward(x, conv_w, conv_b, bn_gamma, bn_beta)
    out = jax.block_until_ready(out)

    ref = jax.block_until_ready(reference_forward(x, conv_w, conv_b, bn_gamma, bn_beta))
    if not jnp.allclose(out, ref, atol=1e-4, rtol=1e-4):
        raise AssertionError("Pallas DownBlock output mismatch vs reference")

    print("KERNEL_OK")
</pallas_src>

<mosaic_0001>
module attributes {stable_mosaic.version = 11 : i64} {
  func.func @conv_stats_kernel(%arg0: i32, %arg1: memref<8x36xf32, #tpu.memory_space<vmem>>, %arg2: memref<36x128xf32, #tpu.memory_space<vmem>>, %arg3: memref<8x128xf32, #tpu.memory_space<vmem>>, %arg4: memref<8x1xf32, #tpu.memory_space<vmem>>, %arg5: memref<8x1xf32, #tpu.memory_space<vmem>>) attributes {dimension_semantics = [#tpu.dimension_semantics<arbitrary>], iteration_bounds = array<i64: 1>, scalar_prefetch = 0 : i64, scratch_operands = 0 : i64, tpu.core_type = #tpu.core_type<tc>, window_params = [{pipeline_mode = #tpu.pipeline_mode<synchronous>, transform_indices = @transform_0, window_bounds = array<i64: 8, 36>}, {transform_indices = @transform_1, window_bounds = array<i64: 36, 128>}, {transform_indices = @transform_2, window_bounds = array<i64: 8, 128>}, {pipeline_mode = #tpu.pipeline_mode<synchronous>, transform_indices = @transform_3, window_bounds = array<i64: 8, 1>}, {pipeline_mode = #tpu.pipeline_mode<synchronous>, transform_indices = @transform_4, window_bounds = array<i64: 8, 1>}]} {
    %c0_i32 = arith.constant 0 : i32
    %0 = arith.cmpi eq, %arg0, %c0_i32 : i32
    %1 = arith.extui %0 : i1 to i32
    %c0_i32_0 = arith.constant 0 : i32
    %2 = arith.cmpi ne, %1, %c0_i32_0 : i32
    scf.if %2 {
      %cst_16 = arith.constant 0.000000e+00 : f32
      %18 = vector.broadcast %cst_16 : f32 to vector<8x1xf32>
      %c0_17 = arith.constant 0 : index
      %c0_18 = arith.constant 0 : index
      %19 = vector.load %arg4[%c0_17, %c0_18] : memref<8x1xf32, #tpu.memory_space<vmem>>, vector<8x1xf32>
      tpu.vector_store %arg4[%c0_17, %c0_18], %18 {strides = array<i32>} : memref<8x1xf32, #tpu.memory_space<vmem>>, vector<8x1xf32>,
      %cst_19 = arith.constant 0.000000e+00 : f32
      %20 = vector.broadcast %cst_19 : f32 to vector<8x1xf32>
      %c0_20 = arith.constant 0 : index
      %c0_21 = arith.constant 0 : index
      %21 = vector.load %arg5[%c0_20, %c0_21] : memref<8x1xf32, #tpu.memory_space<vmem>>, vector<8x1xf32>
      tpu.vector_store %arg5[%c0_20, %c0_21], %20 {strides = array<i32>} : memref<8x1xf32, #tpu.memory_space<vmem>>, vector<8x1xf32>,
    } else {
    }
    %c0 = arith.constant 0 : index
    %c0_1 = arith.constant 0 : index
    %3 = vector.load %arg1[%c0, %c0_1] : memref<8x36xf32, #tpu.memory_space<vmem>>, vector<8x36xf32>
    %c0_2 = arith.constant 0 : index
    %c0_3 = arith.constant 0 : index
    %4 = vector.load %arg2[%c0_2, %c0_3] : memref<36x128xf32, #tpu.memory_space<vmem>>, vector<36x128xf32>
    %cst = arith.constant dense<0.000000e+00> : vector<8x128xf32>
    %5 = tpu.matmul %3, %4, %cst {dimension_numbers = #tpu.dot_dimension_numbers<[1], [0], [0], [1], [0, 0, 1, 1], [], []>} : vector<8x36xf32>, vector<36x128xf32>, vector<8x128xf32> -> vector<8x128xf32>
    %c0_4 = arith.constant 0 : index
    %c0_5 = arith.constant 0 : index
    %6 = vector.load %arg3[%c0_4, %c0_5] : memref<8x128xf32, #tpu.memory_space<vmem>>, vector<8x128xf32>
    tpu.vector_store %arg3[%c0_4, %c0_5], %5 {strides = array<i32>} : memref<8x128xf32, #tpu.memory_space<vmem>>, vector<8x128xf32>,
    %c0_6 = arith.constant 0 : index
    %c0_7 = arith.constant 0 : index
    %7 = vector.load %arg4[%c0_6, %c0_7] : memref<8x1xf32, #tpu.memory_space<vmem>>, vector<8x1xf32>
    %cst_8 = arith.constant dense<0.000000e+00> : vector<8xf32>
    %8 = vector.multi_reduction <add>, %5, %cst_8 [1] : vector<8x128xf32> to vector<8xf32>
    %9 = vector.shape_cast %8 : vector<8xf32> to vector<8x1xf32>
    %10 = arith.addf %7, %9 : vector<8x1xf32>
    %c0_9 = arith.constant 0 : index
    %c0_10 = arith.constant 0 : index
    %11 = vector.load %arg4[%c0_9, %c0_10] : memref<8x1xf32, #tpu.memory_space<vmem>>, vector<8x1xf32>
    tpu.vector_store %arg4[%c0_9, %c0_10], %10 {strides = array<i32>} : memref<8x1xf32, #tpu.memory_space<vmem>>, vector<8x1xf32>,
    %c0_11 = arith.constant 0 : index
    %c0_12 = arith.constant 0 : index
    %12 = vector.load %arg5[%c0_11, %c0_12] : memref<8x1xf32, #tpu.memory_space<vmem>>, vector<8x1xf32>
    %13 = arith.mulf %5, %5 : vector<8x128xf32>
    %cst_13 = arith.constant dense<0.000000e+00> : vector<8xf32>
    %14 = vector.multi_reduction <add>, %13, %cst_13 [1] : vector<8x128xf32> to vector<8xf32>
    %15 = vector.shape_cast %14 : vector<8xf32> to vector<8x1xf32>
    %16 = arith.addf %12, %15 : vector<8x1xf32>
    %c0_14 = arith.constant 0 : index
    %c0_15 = arith.constant 0 : index
    %17 = vector.load %arg5[%c0_14, %c0_15] : memref<8x1xf32, #tpu.memory_space<vmem>>, vector<8x1xf32>
    tpu.vector_store %arg5[%c0_14, %c0_15], %16 {strides = array<i32>} : memref<8x1xf32, #tpu.memory_space<vmem>>, vector<8x1xf32>,
    return
  }
  func.func @transform_0(%arg0: i32) -> (i32, i32) {
    %c0_i32 = arith.constant 0 : i32
    %c0_i32_0 = arith.constant 0 : i32
    %c0_i32_1 = arith.constant 0 : i32
    return %c0_i32, %c0_i32_0 : i32, i32
  }
  func.func @transform_1(%arg0: i32) -> (i32, i32) {
    %c0_i32 = arith.constant 0 : i32
    %c0_i32_0 = arith.constant 0 : i32
    return %c0_i32, %arg0 : i32, i32
  }
  func.func @transform_2(%arg0: i32) -> (i32, i32) {
    %c0_i32 = arith.constant 0 : i32
    %c0_i32_0 = arith.constant 0 : i32
    return %c0_i32, %arg0 : i32, i32
  }
  func.func @transform_3(%arg0: i32) -> (i32, i32) {
    %c0_i32 = arith.constant 0 : i32
    %c0_i32_0 = arith.constant 0 : i32
    %c0_i32_1 = arith.constant 0 : i32
    return %c0_i32, %c0_i32_0 : i32, i32
  }
  func.func @transform_4(%arg0: i32) -> (i32, i32) {
    %c0_i32 = arith.constant 0 : i32
    %c0_i32_0 = arith.constant 0 : i32
    %c0_i32_1 = arith.constant 0 : i32
    return %c0_i32, %c0_i32_0 : i32, i32
  }
}

</mosaic_0001>

<llo_original>
// kernel: tpu_custom_call.1
$region0: #{tpu_custom_call.1}
  #allocation0 [shape = 'u32[]', space=smem, size = 0x4, offset = 0x4, fixed_abs, tag = 'smem constant byte address 0x4 - core index']
  #allocation1 [shape = 'u32[144,128]{1,0:T(1,128)}', space=vmem, size = 0x12000, scoped, tag = 'internal scratch']
  %s0 = inlined_call_operand.hbm [shape: f32[8,36], index: 0, kind: input, shape index: {}]
  %s1 = inlined_call_operand.hbm [shape: f32[36,128], index: 1, kind: input, shape index: {}]
  %s2 = inlined_call_operand.hbm [shape: f32[8,128], index: 2, kind: output, shape index: {0}]
  %s3 = inlined_call_operand.vmem [shape: f32[8,1], index: 3, kind: output, shape index: {1}]
  %s4 = inlined_call_operand.vmem [shape: f32[8,1], index: 4, kind: output, shape index: {2}]
  %5 = xla_tuple %s2, %s3, %s4
  %s6 = sld [smem:[#allocation0]]
  $region46: #{tpu_custom_call.1} parent=0
    _
  %s8 = ssub.s32 1, %s6
  %s9 = scalar_select 0, %s8, %s6
  $region1: #{tpu_custom_call.1} parent=0
    #allocation2 [shape = 'u8[4096]{0}', space=vmem, size = 0x1000, scoped, tag = 'input window, operand 0, single buffered']
    #allocation3 [shape = 's32[1]{0}', space=sflag, size = 0x4, scoped, tag = 'scoped memory for tpu_custom_call.1']
    #allocation4 [shape = 's32[1]{0}', space=sflag, size = 0x4, scoped, tag = 'scoped memory for tpu_custom_call.1']
    #allocation5 [shape = 'u8[20480]{0}', space=vmem, size = 0x5000, scoped, tag = 'input window, operand 1, single buffered']
    #allocation6 [shape = 's32[1]{0}', space=sflag, size = 0x4, scoped, tag = 'scoped memory for tpu_custom_call.1']
    #allocation7 [shape = 'u8[4096]{0}', space=vmem, size = 0x1000, scoped, tag = 'output window, operand 0, single buffered']
    %10 = vsyncpa [#allocation3], 0
    %11 = vsyncpa [#allocation6], 0
    %12 = vsyncpa [#allocation4], 0
    // Predicated region
    $region2: #{tpu_custom_call.1} parent=1 // pred_check
      _
    $region3: #{tpu_custom_call.1} parent=1 // pred_check_branch
      %14 = sbr.rel (0) target = $region5
    $region4: #{tpu_custom_call.1} parent=1 // pred_region
      %s16 = ssub.s32 128, 128
      %17 = vsyncadd [#allocation3], %s16
      %s19 = sshll.u32 [#allocation2], 4
      %s20 = int_to_ptr.vmem [resolvable:$true] %s19
      %22 = dma.hbm_to_vmem [thread:$0]  %s0, 128, %s20, [#allocation3]
    $region5: #{tpu_custom_call.1} parent=1 // pred_fallthru
      _
    // Predicated region
    $region6: #{tpu_custom_call.1} parent=1 // pred_check
      _
    $region7: #{tpu_custom_call.1} parent=1 // pred_check_branch
      %24 = sbr.rel (0) target = $region9
    $region8: #{tpu_custom_call.1} parent=1 // pred_region
      %s26 = ssub.s32 640, 640
      %27 = vsyncadd [#allocation6], %s26
      %s28 = sshll.u32 [#allocation5], 4
      %s29 = int_to_ptr.vmem [resolvable:$true] %s28
      %34 = dma.hbm_to_vmem [thread:$0]  %s1, 640, %s29, [#allocation6], 128, 128, 8
    $region9: #{tpu_custom_call.1} parent=1 // pred_fallthru
      _
    // Predicated region
    $region10: #{tpu_custom_call.1} parent=1 // pred_check
      _
    $region11: #{tpu_custom_call.1} parent=1 // pred_check_branch
      %36 = sbr.rel (0) target = $region13
    $region12: #{tpu_custom_call.1} parent=1 // pred_region
      %37 = dma.done [#allocation3], 128
    $region13: #{tpu_custom_call.1} parent=1 // pred_fallthru
      _
    // Predicated region
    $region14: #{tpu_custom_call.1} parent=1 // pred_check
      _
    $region15: #{tpu_custom_call.1} parent=1 // pred_check_branch
      %39 = sbr.rel (0) target = $region17
    $region16: #{tpu_custom_call.1} parent=1 // pred_region
      %40 = dma.done [#allocation6], 640
    $region17: #{tpu_custom_call.1} parent=1 // pred_fallthru
      _
    %p41 = scmp.eq.s32.totalorder 0, 0
    // Predicated region
    $region18: #{tpu_custom_call.1} parent=1 // pred_check
      %p42 = pneg %p41
    $region19: #{tpu_custom_call.1} parent=1 // pred_check_branch
      %44 = sbr.rel (%p42) target = $region21
    $region20: #{tpu_custom_call.1} parent=1 // pred_region
      %vm45 = vcmask 7168
      %46 = vst.msk [vmem:[%s3] sm:$0xff] %vm45, 0.0
      %47 = vst.msk [vmem:[%s4] sm:$0xff] %vm45, 0.0
    $region21: #{tpu_custom_call.1} parent=1 // pred_fallthru
      _
    %v48 = vld [vmem:[#allocation2] sm:$0xff]
    %v49 = vld [vmem:[#allocation5] sm:$0xff]
    %v50 = vld [vmem:[#allocation5 + $0x8] sm:$0xff]
    %v51 = vld [vmem:[#allocation5 + $0x10] sm:$0xff]
    %v52 = vld [vmem:[#allocation5 + $0x18] sm:$0xff]
    %v53 = vld [vmem:[#allocation5 + $0x20] sm:$0xf]
    %vm54 = vcmask 293888
    %v56 = vsel %vm54, %v48, 0
    %vm58 = vcmask 1043456
    %v60 = vsel %vm58, %v53, 0
    %62 = vmatprep.subr.mxu0 0.0
    %63 = vmatpush1.msra.mxu0 %v49
    %64 = vmatprep.subr.mxu0 0.0
    %65 = vmatpush1.msra.mxu0 %v50
    %66 = vmatprep.subr.mxu0 0.0
    %67 = vmatpush1.msra.mxu0 %v51
    %68 = vmatprep.subr.mxu0 0.0
    %69 = vmatpush1.msra.mxu0 %v52
    %70 = vmatprep.subr.mxu0 0.0
    %71 = vmatpush1.msra.mxu0 %v60
    %72 = vmatprep.subr.mxu0 0.0
    %73 = vmatpush1.msra.mxu0 0.0
    %74 = vmatprep.subr.mxu0 0.0
    %75 = vmatpush1.msra.mxu0 0.0
    %76 = vmatprep.subr.mxu0 0.0
    %77 = vmatpush1.msra.mxu0 0.0
    %78 = vmatprep.subr.mxu0 0.0
    %79 = vmatpush1.msra.mxu0 0.0
    %80 = vmatprep.subr.mxu0 0.0
    %81 = vmatpush1.msra.mxu0 0.0
    %82 = vmatprep.subr.mxu0 0.0
    %83 = vmatpush1.msra.mxu0 0.0
    %84 = vmatprep.subr.mxu0 0.0
    %85 = vmatpush1.msra.mxu0 0.0
    %86 = vmatprep.subr.mxu0 0.0
    %87 = vmatpush1.msra.mxu0 0.0
    %88 = vmatprep.subr.mxu0 0.0
    %89 = vmatpush1.msra.mxu0 0.0
    %90 = vmatprep.subr.mxu0 0.0
    %91 = vmatpush1.msra.mxu0 0.0
    %92 = vmatprep.subr.mxu0 0.0
    %93 = vmatpush1.msra.mxu0 0.0
    %94 = vmatprep.subr.mxu0 0.0
    %95 = vmatpush1.msra.mxu0 0.0
    %96 = vmatprep.subr.mxu0 0.0
    %97 = vmatpush1.msra.mxu0 0.0
    %98 = vmatprep.subr.mxu0 0.0
    %99 = vmatpush1.msra.mxu0 0.0
    %100 = vmatprep.subr.mxu0 0.0
    %101 = vmatpush1.msra.mxu0 0.0
    %102 = vmatprep.subr.mxu0 0.0
    %103 = vmatpush1.msra.mxu0 0.0
    %104 = vmatprep.subr.mxu0 0.0
    %105 = vmatpush1.msra.mxu0 0.0
    %106 = vmatprep.subr.mxu0 0.0
    %107 = vmatpush1.msra.mxu0 0.0
    %108 = vmatprep.subr.mxu0 0.0
    %109 = vmatpush1.msra.mxu0 0.0
    %110 = vmatprep.subr.mxu0 0.0
    %111 = vmatpush1.msra.mxu0 0.0
    %112 = vmatprep.subr.mxu0 0.0
    %113 = vmatpush1.msra.mxu0 0.0
    %114 = vmatprep.subr.mxu0 0.0
    %115 = vmatpush1.msra.mxu0 0.0
    %116 = vmatprep.subr.mxu0 0.0
    %117 = vmatpush1.msra.mxu0 0.0
    %118 = vmatprep.subr.mxu0 0.0
    %119 = vmatpush1.msra.mxu0 0.0
    %120 = vmatprep.subr.mxu0 0.0
    %121 = vmatpush1.msra.mxu0 0.0
    %122 = vmatprep.subr.mxu0 0.0
    %123 = vmatpush1.msra.mxu0 0.0
    %124 = vmatprep.subr.mxu0 0.0
    %125 = vmatpush1.msra.mxu0 0.0
    %126 = vmatprep.mubr.f32.mxu0 0.0
    %127 = vmatmul.mubr.f32.gmra.mrb[0].mxu0 %v56
    %v128 = vpop.f32.mrb[0].mxu0
    %v129 = vadd.f32 0.0, %v128
    %v130 = vpop.f32.mrb[0].mxu0
    %131 = vdwg.mxu0
    %132 = vst [vmem:[#allocation7] sm:$0xff] %v129
    %v133 = vld [vmem:[%s3] sm:$0xff]
    %134 = vadd.xlane.f32.xlu0 %v129
    %v135 = vpop.xlane.xlu0 %134
    %v136 = vadd.f32 %v133, %v135
    %vm137 = vcmask 7168
    %138 = vst.msk [vmem:[%s3] sm:$0xff] %vm137, %v136
    %v139 = vld [vmem:[%s4] sm:$0xff]
    %v140 = vmul.f32 %v129, %v129
    %141 = vadd.xlane.f32.xlu0 %v140
    %v142 = vpop.xlane.xlu0 %141
    %v143 = vadd.f32 %v139, %v142
    %144 = vst.msk [vmem:[%s4] sm:$0xff] %vm137, %v143
    // Predicated region
    $region22: #{tpu_custom_call.1} parent=1 // pred_check
      _
    $region23: #{tpu_custom_call.1} parent=1 // pred_check_branch
      %146 = sbr.rel (0) target = $region25
    $region24: #{tpu_custom_call.1} parent=1 // pred_region
      %s148 = ssub.s32 128, 128
      %149 = vsyncadd [#allocation4], %s148
      %s151 = sshll.u32 [#allocation7], 4
      %s152 = int_to_ptr.vmem [resolvable:$true] %s151
      %154 = dma.vmem_to_hbm [thread:$0]  %s152, 128, %s2, [#allocation4]
    $region25: #{tpu_custom_call.1} parent=1 // pred_fallthru
      _
    // Predicated region
    $region26: #{tpu_custom_call.1} parent=1 // pred_check
      _
    $region27: #{tpu_custom_call.1} parent=1 // pred_check_branch
      %156 = sbr.rel (0) target = $region29
    $region28: #{tpu_custom_call.1} parent=1 // pred_region
      _
    $region29: #{tpu_custom_call.1} parent=1 // pred_fallthru
      _
    // Predicated region
    $region30: #{tpu_custom_call.1} parent=1 // pred_check
      _
    $region31: #{tpu_custom_call.1} parent=1 // pred_check_branch
      %158 = sbr.rel (0) target = $region33
    $region32: #{tpu_custom_call.1} parent=1 // pred_region
      _
    $region33: #{tpu_custom_call.1} parent=1 // pred_fallthru
      _
    // Predicated region
    $region34: #{tpu_custom_call.1} parent=1 // pred_check
      _
    $region35: #{tpu_custom_call.1} parent=1 // pred_check_branch
      %160 = sbr.rel (0) target = $region37
    $region36: #{tpu_custom_call.1} parent=1 // pred_region
      %161 = dma.done [#allocation4], 128
    $region37: #{tpu_custom_call.1} parent=1 // pred_fallthru
      _
    // Predicated region
    $region38: #{tpu_custom_call.1} parent=1 // pred_check
      _
    $region39: #{tpu_custom_call.1} parent=1 // pred_check_branch
      %163 = sbr.rel (0) target = $region41
    $region40: #{tpu_custom_call.1} parent=1 // pred_region
      _
    $region41: #{tpu_custom_call.1} parent=1 // pred_fallthru
      _
    // Predicated region
    $region42: #{tpu_custom_call.1} parent=1 // pred_check
      _
    $region43: #{tpu_custom_call.1} parent=1 // pred_check_branch
      %165 = sbr.rel (0) target = $region45
    $region44: #{tpu_custom_call.1} parent=1 // pred_region
      _
    $region45: #{tpu_custom_call.1} parent=1 // pred_fallthru
      _
    %166 = vsyncpa [#allocation3], 1
    %167 = vsyncpa [#allocation6], 1
    %168 = vsyncpa [#allocation4], 1

</llo_original>
